<compile_context>
chip_gen: v5e
topology: v5e:2x2
jax: 0.10.0
libtpu: 0.0.40
codegen_flags: <defaults>
</compile_context>

<pallas_src>
import functools

import jax
import jax.numpy as jnp
from jax.experimental import pallas as pl
from jax.experimental.pallas import tpu as pltpu

LANE = 128          # lane width: padded working width of the MLP
ROW_ALIGN = 16      # bf16 packs 2 rows/sublane -> align weight-slab row offsets


def _round_up(x, m):
    return (x + m - 1) // m * m


# ---------------------------------------------------------------------------
# Kernel: whole MLP fused; packed weights/biases stay resident in VMEM across
# batch tiles.  All matmuls / stores are lane-dense (width = col_pad = 128).
# ---------------------------------------------------------------------------
def mlp_kernel(x_ref, w_ref, b_ref, o_ref, *, d_in, n_hidden, col_pad,
               row_off, s_off):
    # x_ref: (TB, s_blk, d_in) f32  -- aligned window containing last timestep
    # w_ref: (rows, col_pad)  bf16  -- packed, zero-padded weight slab
    # b_ref: (n_hidden+2, col_pad) f32 -- packed, zero-padded bias slab
    # o_ref: (TB, col_pad)    f32   -- lane-dense output; wrapper drops padding
    x = x_ref[:, s_off, :].astype(jnp.bfloat16)     # select last timestep

    # layer 0: input projection + ReLU (padded lanes stay exactly 0)
    h = jnp.dot(x, w_ref[0:d_in, :], preferred_element_type=jnp.float32)
    h = jnp.maximum(h + b_ref[0:1, :], 0.0)

    # hidden blocks (n_hidden is a static Python int -> unrolled straight-line)
    for i in range(n_hidden):
        r = row_off[i]
        h = jnp.dot(h.astype(jnp.bfloat16), w_ref[r:r + col_pad, :],
                    preferred_element_type=jnp.float32)
        h = jnp.maximum(h + b_ref[i + 1:i + 2, :], 0.0)

    # output projection (no ReLU); columns >= out_dim are exactly 0
    r = row_off[n_hidden]
    y = jnp.dot(h.astype(jnp.bfloat16), w_ref[r:r + col_pad, :],
                preferred_element_type=jnp.float32)
    o_ref[...] = y + b_ref[n_hidden + 1:n_hidden + 2, :]


# ---------------------------------------------------------------------------
# Parameter packing (done once at init time, not in the hot path).
# Weight slab rows:  [0, d_in)          -> W1        (cols [0, hidden))
#                    [off_i, off_i+128) -> W_hid_i   (cols [0, hidden))
#                    [off_L, off_L+128) -> W_out     (cols [0, out_dim))
# Bias slab rows:    0..n_hidden        -> b1..b_{L+1} (cols [0, hidden))
#                    n_hidden+1         -> b_out       (cols [0, out_dim))
# Padding is exactly zero (kept under astype to bf16), so padded lanes of `h`
# remain exactly zero through every layer.
# ---------------------------------------------------------------------------
def pack_params(params, input_dim, hidden_dim, out_dim):
    n_hidden = len(params) - 2
    col_pad = _round_up(max(hidden_dim, out_dim), LANE)
    d_in_pad = _round_up(input_dim, ROW_ALIGN)
    rows = d_in_pad + (n_hidden + 1) * col_pad

    w_pack = jnp.zeros((rows, col_pad), jnp.float32)
    b_pack = jnp.zeros((n_hidden + 2, col_pad), jnp.float32)

    w, b = params[0]
    w_pack = w_pack.at[0:input_dim, 0:hidden_dim].set(w)
    b_pack = b_pack.at[0, 0:hidden_dim].set(jnp.ravel(b))

    row_off = []
    r = d_in_pad
    for i in range(n_hidden):
        w, b = params[1 + i]
        w_pack = w_pack.at[r:r + hidden_dim, 0:hidden_dim].set(w)
        b_pack = b_pack.at[1 + i, 0:hidden_dim].set(jnp.ravel(b))
        row_off.append(r)
        r += col_pad

    w, b = params[-1]
    w_pack = w_pack.at[r:r + hidden_dim, 0:out_dim].set(w)
    b_pack = b_pack.at[n_hidden + 1, 0:out_dim].set(jnp.ravel(b))
    row_off.append(r)

    # bf16 operands -> native MXU path; biases stay f32.
    return w_pack.astype(jnp.bfloat16), b_pack, tuple(row_off), col_pad


# ---------------------------------------------------------------------------
# Wrapper
# ---------------------------------------------------------------------------
def _choose_batch_tile(batch, batch_tile):
    if batch <= 8:
        return batch                       # full-array block for tiny batches
    # >= 2 tiles so v7x's second TensorCore gets work; tb stays a multiple of 8
    tb = _round_up(pl.cdiv(batch, 2), 8)
    return max(8, min(tb, batch_tile))


def basic_model_forward(x, w_pack, b_pack, *, input_dim, n_hidden, row_off,
                        col_pad, out_dim, batch_tile=1024, trim_output=True):
    """x: (batch, seq, input_dim) f32.  Returns (batch, out_dim) f32."""
    batch, seq, d_in = x.shape
    assert d_in == input_dim

    tb = _choose_batch_tile(batch, batch_tile)
    grid = (pl.cdiv(batch, tb),)

    # Last-timestep window expressed in the BlockSpec (no wrapper-side slice of
    # x in HBM).  The seq block is either the full seq or an aligned block of 8
    # containing the last timestep; the exact row is picked in-kernel.
    if seq % 8 == 0:
        s_blk = min(seq, 8)
        s_idx = seq // s_blk - 1
        s_off = s_blk - 1
    else:
        s_blk, s_idx, s_off = seq, 0, seq - 1
    # TODO(synk): if upstream can hand us x_last = x[:, -1] contiguously, feed
    # that directly and drop the seq window entirely (pure input-BW saving).

    kernel = functools.partial(mlp_kernel, d_in=input_dim, n_hidden=n_hidden,
                               col_pad=col_pad, row_off=row_off, s_off=s_off)

    # Scoped-VMEM estimate; only override the default when a big tile would
    # approach v5e's 16 MiB scoped-VMEM default (v6e/v7x default is 32 MiB).
    vmem_est = (2 * tb * s_blk * input_dim * 4          # x tiles (double-buffered)
                + 2 * tb * col_pad * 4                  # out tiles
                + 2 * w_pack.size * 2 + 2 * b_pack.size * 4
                + 4 * tb * col_pad * 4)                 # h intermediates headroom
    cp_kwargs = dict(dimension_semantics=("parallel",))
    if vmem_est > (12 << 20):
        cp_kwargs["vmem_limit_bytes"] = int(min(2 * vmem_est, 60 << 20))

    out_padded = pl.pallas_call(
        kernel,
        out_shape=jax.ShapeDtypeStruct((batch, col_pad), jnp.float32),
        grid=grid,
        in_specs=[
            pl.BlockSpec((tb, s_blk, input_dim), lambda i: (i, s_idx, 0)),
            # Packed weights / biases: constant block index -> fetched once and
            # VMEM-resident across all batch tiles.
            # TODO(synk): pin to a single buffer (pipeline_mode=pl.Buffered(1))
            # once verified on the target jax build; saves ~110 KB of VMEM.
            pl.BlockSpec(w_pack.shape, lambda i: (0, 0)),
            pl.BlockSpec(b_pack.shape, lambda i: (0, 0)),
        ],
        out_specs=pl.BlockSpec((tb, col_pad), lambda i: (i, 0)),
        compiler_params=pltpu.CompilerParams(**cp_kwargs),
    )(x, w_pack, b_pack)

    if not trim_output:
        return out_padded          # lane-dense (batch, 128); cols >= out_dim are 0
    # Glue: drop lane padding -> (batch, out_dim).  Use trim_output=False if the
    # consumer can read the padded slab directly (saves an HBM pass, mainly v5e).
    return out_padded[:, :out_dim]


# ---------------------------------------------------------------------------
# Init + pure-JAX reference
# ---------------------------------------------------------------------------
def init_params(key, input_dim, hidden_dim=64, num_layers=2, out_dim=3):
    """Deterministic init mirroring nn.Linear default (U[-1/sqrt(fan_in), +])."""
    dims = [(input_dim, hidden_dim)]
    dims += [(hidden_dim, hidden_dim)] * num_layers
    dims += [(hidden_dim, out_dim)]
    params = []
    for fan_in, fan_out in dims:
        key, kw, kb = jax.random.split(key, 3)
        bound = 1.0 / (fan_in ** 0.5)
        w = jax.random.uniform(kw, (fan_in, fan_out), jnp.float32, -bound, bound)
        b = jax.random.uniform(kb, (1, fan_out), jnp.float32, -bound, bound)
        params.append((w, b))
    return params


def reference_forward(x, params):
    h = x[:, -1]
    (w1, b1), (w2, b2), (w3, b3), (w4, b4) = params
    h = jnp.maximum(h @ w1 + b1, 0.0)
    h = jnp.maximum(h @ w2 + b2, 0.0)
    h = jnp.maximum(h @ w3 + b3, 0.0)
    return h @ w4 + b4


if __name__ == "__main__":
    key = jax.random.PRNGKey(0)
    key, kx = jax.random.split(key)

    batch, seq, input_dim, hidden_dim, num_layers, out_dim = 2, 8, 32, 64, 2, 3
    x = jax.random.normal(kx, (batch, seq, input_dim), jnp.float32)
    params = init_params(key, input_dim, hidden_dim, num_layers, out_dim)
    w_pack, b_pack, row_off, col_pad = pack_params(
        params, input_dim, hidden_dim, out_dim)

    out = basic_model_forward(
        x, w_pack, b_pack, input_dim=input_dim, n_hidden=num_layers,
        row_off=row_off, col_pad=col_pad, out_dim=out_dim)
    out = jax.block_until_ready(out)

    ref = reference_forward(x, params)
    assert out.shape == (batch, out_dim), out.shape
    # bf16 matmul operands with f32 accumulation -> compare at bf16-level tol.
    assert jnp.allclose(out, ref, atol=5e-2, rtol=5e-2), "mismatch vs reference"

    print("KERNEL_OK")
</pallas_src>

<mosaic_0001>
module attributes {stable_mosaic.version = 11 : i64} {
  func.func @mlp_kernel(%arg0: i32, %arg1: memref<2x8x32xf32, #tpu.memory_space<vmem>>, %arg2: memref<416x128xbf16, #tpu.memory_space<vmem>>, %arg3: memref<4x128xf32, #tpu.memory_space<vmem>>, %arg4: memref<2x128xf32, #tpu.memory_space<vmem>>) attributes {dimension_semantics = [#tpu.dimension_semantics<parallel>], iteration_bounds = array<i64: 1>, scalar_prefetch = 0 : i64, scratch_operands = 0 : i64, tpu.core_type = #tpu.core_type<tc>, window_params = [{transform_indices = @transform_0, window_bounds = array<i64: 2, 8, 32>}, {pipeline_mode = #tpu.pipeline_mode<synchronous>, transform_indices = @transform_1, window_bounds = array<i64: 416, 128>}, {pipeline_mode = #tpu.pipeline_mode<synchronous>, transform_indices = @transform_2, window_bounds = array<i64: 4, 128>}, {transform_indices = @transform_3, window_bounds = array<i64: 2, 128>}]} {
    %c0 = arith.constant 0 : index
    %c7 = arith.constant 7 : index
    %c0_0 = arith.constant 0 : index
    %0 = vector.load %arg1[%c0, %c7, %c0_0] : memref<2x8x32xf32, #tpu.memory_space<vmem>>, vector<2x1x32xf32>
    %1 = vector.shape_cast %0 : vector<2x1x32xf32> to vector<2x32xf32>
    %2 = arith.truncf %1 : vector<2x32xf32> to vector<2x32xbf16>
    %c0_1 = arith.constant 0 : index
    %c0_2 = arith.constant 0 : index
    %3 = vector.load %arg2[%c0_1, %c0_2] : memref<416x128xbf16, #tpu.memory_space<vmem>>, vector<32x128xbf16>
    %cst = arith.constant dense<0.000000e+00> : vector<2x128xf32>
    %4 = tpu.matmul %2, %3, %cst {dimension_numbers = #tpu.dot_dimension_numbers<[1], [0], [0], [1], [0, 0, 1, 1], [], []>} : vector<2x32xbf16>, vector<32x128xbf16>, vector<2x128xf32> -> vector<2x128xf32>
    %c0_3 = arith.constant 0 : index
    %c0_4 = arith.constant 0 : index
    %5 = vector.load %arg3[%c0_3, %c0_4] : memref<4x128xf32, #tpu.memory_space<vmem>>, vector<1x128xf32>
    %6 = vector.broadcast %5 : vector<1x128xf32> to vector<2x128xf32>
    %7 = arith.addf %4, %6 : vector<2x128xf32>
    %cst_5 = arith.constant 0.000000e+00 : f32
    %8 = vector.broadcast %cst_5 : f32 to vector<2x128xf32>
    %9 = arith.maximumf %7, %8 : vector<2x128xf32>
    %10 = arith.truncf %9 : vector<2x128xf32> to vector<2x128xbf16>
    %c32 = arith.constant 32 : index
    %c0_6 = arith.constant 0 : index
    %11 = vector.load %arg2[%c32, %c0_6] : memref<416x128xbf16, #tpu.memory_space<vmem>>, vector<128x128xbf16>
    %cst_7 = arith.constant dense<0.000000e+00> : vector<2x128xf32>
    %12 = tpu.matmul %10, %11, %cst_7 {dimension_numbers = #tpu.dot_dimension_numbers<[1], [0], [0], [1], [0, 0, 1, 1], [], []>} : vector<2x128xbf16>, vector<128x128xbf16>, vector<2x128xf32> -> vector<2x128xf32>
    %c1 = arith.constant 1 : index
    %c0_8 = arith.constant 0 : index
    %13 = vector.load %arg3[%c1, %c0_8] : memref<4x128xf32, #tpu.memory_space<vmem>>, vector<1x128xf32>
    %14 = vector.broadcast %13 : vector<1x128xf32> to vector<2x128xf32>
    %15 = arith.addf %12, %14 : vector<2x128xf32>
    %cst_9 = arith.constant 0.000000e+00 : f32
    %16 = vector.broadcast %cst_9 : f32 to vector<2x128xf32>
    %17 = arith.maximumf %15, %16 : vector<2x128xf32>
    %18 = arith.truncf %17 : vector<2x128xf32> to vector<2x128xbf16>
    %c160 = arith.constant 160 : index
    %c0_10 = arith.constant 0 : index
    %19 = vector.load %arg2[%c160, %c0_10] : memref<416x128xbf16, #tpu.memory_space<vmem>>, vector<128x128xbf16>
    %cst_11 = arith.constant dense<0.000000e+00> : vector<2x128xf32>
    %20 = tpu.matmul %18, %19, %cst_11 {dimension_numbers = #tpu.dot_dimension_numbers<[1], [0], [0], [1], [0, 0, 1, 1], [], []>} : vector<2x128xbf16>, vector<128x128xbf16>, vector<2x128xf32> -> vector<2x128xf32>
    %c2 = arith.constant 2 : index
    %c0_12 = arith.constant 0 : index
    %21 = vector.load %arg3[%c2, %c0_12] : memref<4x128xf32, #tpu.memory_space<vmem>>, vector<1x128xf32>
    %22 = vector.broadcast %21 : vector<1x128xf32> to vector<2x128xf32>
    %23 = arith.addf %20, %22 : vector<2x128xf32>
    %cst_13 = arith.constant 0.000000e+00 : f32
    %24 = vector.broadcast %cst_13 : f32 to vector<2x128xf32>
    %25 = arith.maximumf %23, %24 : vector<2x128xf32>
    %26 = arith.truncf %25 : vector<2x128xf32> to vector<2x128xbf16>
    %c288 = arith.constant 288 : index
    %c0_14 = arith.constant 0 : index
    %27 = vector.load %arg2[%c288, %c0_14] : memref<416x128xbf16, #tpu.memory_space<vmem>>, vector<128x128xbf16>
    %cst_15 = arith.constant dense<0.000000e+00> : vector<2x128xf32>
    %28 = tpu.matmul %26, %27, %cst_15 {dimension_numbers = #tpu.dot_dimension_numbers<[1], [0], [0], [1], [0, 0, 1, 1], [], []>} : vector<2x128xbf16>, vector<128x128xbf16>, vector<2x128xf32> -> vector<2x128xf32>
    %c3 = arith.constant 3 : index
    %c0_16 = arith.constant 0 : index
    %29 = vector.load %arg3[%c3, %c0_16] : memref<4x128xf32, #tpu.memory_space<vmem>>, vector<1x128xf32>
    %30 = vector.broadcast %29 : vector<1x128xf32> to vector<2x128xf32>
    %31 = arith.addf %28, %30 : vector<2x128xf32>
    %c0_17 = arith.constant 0 : index
    %c0_18 = arith.constant 0 : index
    %32 = vector.load %arg4[%c0_17, %c0_18] : memref<2x128xf32, #tpu.memory_space<vmem>>, vector<2x128xf32>
    tpu.vector_store %arg4[%c0_17, %c0_18], %31 {strides = array<i32>} : memref<2x128xf32, #tpu.memory_space<vmem>>, vector<2x128xf32>,
    return
  }
  func.func @transform_0(%arg0: i32) -> (i32, i32, i32) {
    %c0_i32 = arith.constant 0 : i32
    %c0_i32_0 = arith.constant 0 : i32
    %c0_i32_1 = arith.constant 0 : i32
    return %arg0, %c0_i32, %c0_i32_0 : i32, i32, i32
  }
  func.func @transform_1(%arg0: i32) -> (i32, i32) {
    %c0_i32 = arith.constant 0 : i32
    %c0_i32_0 = arith.constant 0 : i32
    %c0_i32_1 = arith.constant 0 : i32
    return %c0_i32, %c0_i32_0 : i32, i32
  }
  func.func @transform_2(%arg0: i32) -> (i32, i32) {
    %c0_i32 = arith.constant 0 : i32
    %c0_i32_0 = arith.constant 0 : i32
    %c0_i32_1 = arith.constant 0 : i32
    return %c0_i32, %c0_i32_0 : i32, i32
  }
  func.func @transform_3(%arg0: i32) -> (i32, i32) {
    %c0_i32 = arith.constant 0 : i32
    %c0_i32_0 = arith.constant 0 : i32
    return %arg0, %c0_i32 : i32, i32
  }
}

</mosaic_0001>

<llo_original>
// kernel: tpu_custom_call.1
$region0: #{tpu_custom_call.1}
  #allocation0 [shape = 'u32[]', space=smem, size = 0x4, offset = 0x4, fixed_abs, tag = 'smem constant byte address 0x4 - core index']
  #allocation1 [shape = 'u32[72,128]{1,0:T(1,128)}', space=vmem, size = 0x9000, scoped, tag = 'internal scratch']
  %s0 = inlined_call_operand.hbm [shape: f32[2,8,32], index: 0, kind: input, shape index: {}]
  %s1 = inlined_call_operand.hbm [shape: bf16[416,128], index: 1, kind: input, shape index: {}]
  %s2 = inlined_call_operand.hbm [shape: f32[4,128], index: 2, kind: input, shape index: {}]
  %s3 = inlined_call_operand.hbm [shape: f32[2,128], index: 3, kind: output, shape index: {}]
  %s4 = sld [smem:[#allocation0]]
  $region34: #{tpu_custom_call.1} parent=0
    _
  %s6 = ssub.s32 1, %s4
  %s7 = scalar_select 0, %s6, %s4
  $region1: #{tpu_custom_call.1} parent=0
    #allocation2 [shape = 'u8[8192]{0}', space=vmem, size = 0x2000, scoped, tag = 'input window, operand 0, single buffered']
    #allocation3 [shape = 's32[1]{0}', space=sflag, size = 0x4, scoped, tag = 'scoped memory for tpu_custom_call.1']
    #allocation4 [shape = 's32[1]{0}', space=sflag, size = 0x4, scoped, tag = 'scoped memory for tpu_custom_call.1']
    #allocation5 [shape = 'u8[106496]{0}', space=vmem, size = 0x1a000, scoped, tag = 'input window, operand 1, single buffered']
    #allocation6 [shape = 's32[1]{0}', space=sflag, size = 0x4, scoped, tag = 'scoped memory for tpu_custom_call.1']
    #allocation7 [shape = 'u8[2048]{0}', space=vmem, size = 0x800, scoped, tag = 'input window, operand 2, single buffered']
    #allocation8 [shape = 'u8[1024]{0}', space=vmem, size = 0x400, scoped, tag = 'output window, operand 0, single buffered']
    %8 = vsyncpa [#allocation3], 0
    %9 = vsyncpa [#allocation6], 0
    %10 = vsyncpa [#allocation4], 0
    // Predicated region
    $region2: #{tpu_custom_call.1} parent=1 // pred_check
      _
    $region3: #{tpu_custom_call.1} parent=1 // pred_check_branch
      %12 = sbr.rel (0) target = $region5
    $region4: #{tpu_custom_call.1} parent=1 // pred_region
      %14 = vsyncadd [#allocation3], 0
      %s15 = sshll.u32 %s0, 4
      %s16 = int_to_ptr.hbm [resolvable:$true] %s15
      %s17 = sshll.u32 [#allocation2], 4
      %s18 = int_to_ptr.vmem [resolvable:$true] %s17
      %23 = dma.hbm_to_vmem [thread:$0]  %s16, 256, %s18, [#allocation3], 128, 128, 8
    $region5: #{tpu_custom_call.1} parent=1 // pred_fallthru
      _
    // Predicated region
    $region6: #{tpu_custom_call.1} parent=1 // pred_check
      _
    $region7: #{tpu_custom_call.1} parent=1 // pred_check_branch
      %25 = sbr.rel (0) target = $region9
    $region8: #{tpu_custom_call.1} parent=1 // pred_region
      %27 = vsyncadd [#allocation6], 0
      %s28 = sshll.u32 %s1, 4
      %s29 = int_to_ptr.hbm [resolvable:$true] %s28
      %s30 = sshll.u32 [#allocation5], 4
      %s31 = int_to_ptr.vmem [resolvable:$true] %s30
      %36 = dma.hbm_to_vmem [thread:$0]  %s29, 3328, %s31, [#allocation6], 64, 64, 4
    $region9: #{tpu_custom_call.1} parent=1 // pred_fallthru
      _
    // Predicated region
    $region10: #{tpu_custom_call.1} parent=1 // pred_check
      _
    $region11: #{tpu_custom_call.1} parent=1 // pred_check_branch
      %38 = sbr.rel (0) target = $region13
    $region12: #{tpu_custom_call.1} parent=1 // pred_region
      %40 = vsyncadd [#allocation6], 0
      %s42 = sshll.u32 %s2, 4
      %s43 = int_to_ptr.hbm [resolvable:$true] %s42
      %s44 = sshll.u32 [#allocation7], 4
      %s45 = int_to_ptr.vmem [resolvable:$true] %s44
      %47 = dma.hbm_to_vmem [thread:$0]  %s43, 64, %s45, [#allocation6]
    $region13: #{tpu_custom_call.1} parent=1 // pred_fallthru
      _
    // Predicated region
    $region14: #{tpu_custom_call.1} parent=1 // pred_check
      _
    $region15: #{tpu_custom_call.1} parent=1 // pred_check_branch
      %49 = sbr.rel (0) target = $region17
    $region16: #{tpu_custom_call.1} parent=1 // pred_region
      %51 = dma.done [#allocation3], 256
    $region17: #{tpu_custom_call.1} parent=1 // pred_fallthru
      _
    // Predicated region
    $region18: #{tpu_custom_call.1} parent=1 // pred_check
      _
    $region19: #{tpu_custom_call.1} parent=1 // pred_check_branch
      %53 = sbr.rel (0) target = $region21
    $region20: #{tpu_custom_call.1} parent=1 // pred_region
      %55 = dma.done [#allocation6], 3328
    $region21: #{tpu_custom_call.1} parent=1 // pred_fallthru
      _
    // Predicated region
    $region22: #{tpu_custom_call.1} parent=1 // pred_check
      _
    $region23: #{tpu_custom_call.1} parent=1 // pred_check_branch
      %57 = sbr.rel (0) target = $region25
    $region24: #{tpu_custom_call.1} parent=1 // pred_region
      %59 = dma.done [#allocation6], 64
    $region25: #{tpu_custom_call.1} parent=1 // pred_fallthru
      _
    %v61 = vld [vmem:[#allocation2 + $0x7] sm:$0x1]
    %v62 = vld [vmem:[#allocation2 + $0xf] sm:$0x1]
    %v63 = vpack.c.bf16 %v61, %v61
    %v64 = vpack.c.bf16 %v62, %v62
    %v65 = vld [vmem:[#allocation5] sm:$0xf]
    %v66 = vld [vmem:[#allocation5 + $0x4] sm:$0xf]
    %v67 = vld [vmem:[#allocation5 + $0x8] sm:$0xf]
    %v68 = vld [vmem:[#allocation5 + $0xc] sm:$0xf]
    %v69 = vld [vmem:[#allocation7] sm:$0x1]
    %v70 = vperm.slane %v69, 0
    %v73 = vunpack.c.l.b16 %v63
    %v74 = vunpack.c.l.b16 %v64
    %v75 = vrot.slane %v74, 7
    %vm76 = vcmask 1041409
    %v77 = vsel %vm76, %v75, %v73
    %v78 = vpack.c.b16 %v77, %v77
    %v83 = vunpack.c.l.b16 %v65
    %v84 = vunpack.c.l.b16 %v66
    %v85 = vunpack.c.l.b16 %v67
    %v86 = vunpack.c.l.b16 %v68
    %v87 = vpack.c.b16 %v84, %v83
    %v88 = vpack.c.b16 %v86, %v85
    %vm91 = vcmask 261120
    %v93 = vsel %vm91, %v78, 0
    %95 = vmatpush.bf16.msra.mxu0 0
    %96 = vmatpush.bf16.msra.mxu0 0
    %97 = vmatpush.bf16.msra.mxu0 0
    %98 = vmatpush.bf16.msra.mxu0 0
    %99 = vmatpush.bf16.msra.mxu0 0
    %100 = vmatpush.bf16.msra.mxu0 0
    %101 = vmatpush.bf16.msra.mxu0 %v88
    %102 = vmatpush.bf16.msra.mxu0 %v87
    %103 = vmatmul.bf16.gmra.mxu0 %v93
    %v104 = vpop.f32.mrf.mxu0
    %v105 = vadd.f32 %v70, %v104
    %v106 = vpop.f32.mrf.mxu0
    %107 = vdwg.mxu0
    %v108 = vmax.f32 %v105, 0.0
    %v109 = vpack.c.bf16 %v108, %v108
    %v110 = vld [vmem:[#allocation5 + $0x10] sm:$0xf]
    %v111 = vld [vmem:[#allocation5 + $0x14] sm:$0xf]
    %v112 = vld [vmem:[#allocation5 + $0x18] sm:$0xf]
    %v113 = vld [vmem:[#allocation5 + $0x1c] sm:$0xf]
    %v114 = vld [vmem:[#allocation5 + $0x20] sm:$0xf]
    %v115 = vld [vmem:[#allocation5 + $0x24] sm:$0xf]
    %v116 = vld [vmem:[#allocation5 + $0x28] sm:$0xf]
    %v117 = vld [vmem:[#allocation5 + $0x2c] sm:$0xf]
    %v118 = vld [vmem:[#allocation5 + $0x30] sm:$0xf]
    %v119 = vld [vmem:[#allocation5 + $0x34] sm:$0xf]
    %v120 = vld [vmem:[#allocation5 + $0x38] sm:$0xf]
    %v121 = vld [vmem:[#allocation5 + $0x3c] sm:$0xf]
    %v122 = vld [vmem:[#allocation5 + $0x40] sm:$0xf]
    %v123 = vld [vmem:[#allocation5 + $0x44] sm:$0xf]
    %v124 = vld [vmem:[#allocation5 + $0x48] sm:$0xf]
    %v125 = vld [vmem:[#allocation5 + $0x4c] sm:$0xf]
    %v126 = vld [vmem:[#allocation7 + $0x1] sm:$0x1]
    %v127 = vperm.slane %v126, 0
    %v144 = vunpack.c.l.b16 %v110
    %v145 = vunpack.c.l.b16 %v111
    %v146 = vunpack.c.l.b16 %v112
    %v147 = vunpack.c.l.b16 %v113
    %v148 = vunpack.c.l.b16 %v114
    %v149 = vunpack.c.l.b16 %v115
    %v150 = vunpack.c.l.b16 %v116
    %v151 = vunpack.c.l.b16 %v117
    %v152 = vunpack.c.l.b16 %v118
    %v153 = vunpack.c.l.b16 %v119
    %v154 = vunpack.c.l.b16 %v120
    %v155 = vunpack.c.l.b16 %v121
    %v156 = vunpack.c.l.b16 %v122
    %v157 = vunpack.c.l.b16 %v123
    %v158 = vunpack.c.l.b16 %v124
    %v159 = vunpack.c.l.b16 %v125
    %v160 = vpack.c.b16 %v145, %v144
    %v161 = vpack.c.b16 %v147, %v146
    %v162 = vpack.c.b16 %v149, %v148
    %v163 = vpack.c.b16 %v151, %v150
    %v164 = vpack.c.b16 %v153, %v152
    %v165 = vpack.c.b16 %v155, %v154
    %v166 = vpack.c.b16 %v157, %v156
    %v167 = vpack.c.b16 %v159, %v158
    %176 = vmatpush.bf16.msra.mxu0 %v167
    %177 = vmatpush.bf16.msra.mxu0 %v166
    %178 = vmatpush.bf16.msra.mxu0 %v165
    %179 = vmatpush.bf16.msra.mxu0 %v164
    %180 = vmatpush.bf16.msra.mxu0 %v163
    %181 = vmatpush.bf16.msra.mxu0 %v162
    %182 = vmatpush.bf16.msra.mxu0 %v161
    %183 = vmatpush.bf16.msra.mxu0 %v160
    %184 = vmatmul.bf16.gmra.mxu0 %v109
    %v185 = vpop.f32.mrf.mxu0
    %v186 = vadd.f32 %v127, %v185
    %v187 = vpop.f32.mrf.mxu0
    %188 = vdwg.mxu0
    %v189 = vmax.f32 %v186, 0.0
    %v190 = vpack.c.bf16 %v189, %v189
    %v191 = vld [vmem:[#allocation5 + $0x50] sm:$0xf]
    %v192 = vld [vmem:[#allocation5 + $0x54] sm:$0xf]
    %v193 = vld [vmem:[#allocation5 + $0x58] sm:$0xf]
    %v194 = vld [vmem:[#allocation5 + $0x5c] sm:$0xf]
    %v195 = vld [vmem:[#allocation5 + $0x60] sm:$0xf]
    %v196 = vld [vmem:[#allocation5 + $0x64] sm:$0xf]
    %v197 = vld [vmem:[#allocation5 + $0x68] sm:$0xf]
    %v198 = vld [vmem:[#allocation5 + $0x6c] sm:$0xf]
    %v199 = vld [vmem:[#allocation5 + $0x70] sm:$0xf]
    %v200 = vld [vmem:[#allocation5 + $0x74] sm:$0xf]
    %v201 = vld [vmem:[#allocation5 + $0x78] sm:$0xf]
    %v202 = vld [vmem:[#allocation5 + $0x7c] sm:$0xf]
    %v203 = vld [vmem:[#allocation5 + $0x80] sm:$0xf]
    %v204 = vld [vmem:[#allocation5 + $0x84] sm:$0xf]
    %v205 = vld [vmem:[#allocation5 + $0x88] sm:$0xf]
    %v206 = vld [vmem:[#allocation5 + $0x8c] sm:$0xf]
    %v207 = vld [vmem:[#allocation7 + $0x2] sm:$0x1]
    %v208 = vperm.slane %v207, 0
    %v225 = vunpack.c.l.b16 %v191
    %v226 = vunpack.c.l.b16 %v192
    %v227 = vunpack.c.l.b16 %v193
    %v228 = vunpack.c.l.b16 %v194
    %v229 = vunpack.c.l.b16 %v195
    %v230 = vunpack.c.l.b16 %v196
    %v231 = vunpack.c.l.b16 %v197
    %v232 = vunpack.c.l.b16 %v198
    %v233 = vunpack.c.l.b16 %v199
    %v234 = vunpack.c.l.b16 %v200
    %v235 = vunpack.c.l.b16 %v201
    %v236 = vunpack.c.l.b16 %v202
    %v237 = vunpack.c.l.b16 %v203
    %v238 = vunpack.c.l.b16 %v204
    %v239 = vunpack.c.l.b16 %v205
    %v240 = vunpack.c.l.b16 %v206
    %v241 = vpack.c.b16 %v226, %v225
    %v242 = vpack.c.b16 %v228, %v227
    %v243 = vpack.c.b16 %v230, %v229
    %v244 = vpack.c.b16 %v232, %v231
    %v245 = vpack.c.b16 %v234, %v233
    %v246 = vpack.c.b16 %v236, %v235
    %v247 = vpack.c.b16 %v238, %v237
    %v248 = vpack.c.b16 %v240, %v239
    %257 = vmatpush.bf16.msra.mxu0 %v248
    %258 = vmatpush.bf16.msra.mxu0 %v247
    %259 = vmatpush.bf16.msra.mxu0 %v246
    %260 = vmatpush.bf16.msra.mxu0 %v245
    %261 = vmatpush.bf16.msra.mxu0 %v244
    %262 = vmatpush.bf16.msra.mxu0 %v243
    %263 = vmatpush.bf16.msra.mxu0 %v242
    %264 = vmatpush.bf16.msra.mxu0 %v241
    %265 = vmatmul.bf16.gmra.mxu0 %v190
    %v266 = vpop.f32.mrf.mxu0
    %v267 = vadd.f32 %v208, %v266
    %v268 = vpop.f32.mrf.mxu0
    %269 = vdwg.mxu0
    %v270 = vmax.f32 %v267, 0.0
    %v271 = vpack.c.bf16 %v270, %v270
    %v272 = vld [vmem:[#allocation5 + $0x90] sm:$0xf]
    %v273 = vld [vmem:[#allocation5 + $0x94] sm:$0xf]
    %v274 = vld [vmem:[#allocation5 + $0x98] sm:$0xf]
    %v275 = vld [vmem:[#allocation5 + $0x9c] sm:$0xf]
    %v276 = vld [vmem:[#allocation5 + $0xa0] sm:$0xf]
    %v277 = vld [vmem:[#allocation5 + $0xa4] sm:$0xf]
    %v278 = vld [vmem:[#allocation5 + $0xa8] sm:$0xf]
    %v279 = vld [vmem:[#allocation5 + $0xac] sm:$0xf]
    %v280 = vld [vmem:[#allocation5 + $0xb0] sm:$0xf]
    %v281 = vld [vmem:[#allocation5 + $0xb4] sm:$0xf]
    %v282 = vld [vmem:[#allocation5 + $0xb8] sm:$0xf]
    %v283 = vld [vmem:[#allocation5 + $0xbc] sm:$0xf]
    %v284 = vld [vmem:[#allocation5 + $0xc0] sm:$0xf]
    %v285 = vld [vmem:[#allocation5 + $0xc4] sm:$0xf]
    %v286 = vld [vmem:[#allocation5 + $0xc8] sm:$0xf]
    %v287 = vld [vmem:[#allocation5 + $0xcc] sm:$0xf]
    %v288 = vld [vmem:[#allocation7 + $0x3] sm:$0x1]
    %v289 = vperm.slane %v288, 0
    %v306 = vunpack.c.l.b16 %v272
    %v307 = vunpack.c.l.b16 %v273
    %v308 = vunpack.c.l.b16 %v274
    %v309 = vunpack.c.l.b16 %v275
    %v310 = vunpack.c.l.b16 %v276
    %v311 = vunpack.c.l.b16 %v277
    %v312 = vunpack.c.l.b16 %v278
    %v313 = vunpack.c.l.b16 %v279
    %v314 = vunpack.c.l.b16 %v280
    %v315 = vunpack.c.l.b16 %v281
    %v316 = vunpack.c.l.b16 %v282
    %v317 = vunpack.c.l.b16 %v283
    %v318 = vunpack.c.l.b16 %v284
    %v319 = vunpack.c.l.b16 %v285
    %v320 = vunpack.c.l.b16 %v286
    %v321 = vunpack.c.l.b16 %v287
    %v322 = vpack.c.b16 %v307, %v306
    %v323 = vpack.c.b16 %v309, %v308
    %v324 = vpack.c.b16 %v311, %v310
    %v325 = vpack.c.b16 %v313, %v312
    %v326 = vpack.c.b16 %v315, %v314
    %v327 = vpack.c.b16 %v317, %v316
    %v328 = vpack.c.b16 %v319, %v318
    %v329 = vpack.c.b16 %v321, %v320
    %338 = vmatpush.bf16.msra.mxu0 %v329
    %339 = vmatpush.bf16.msra.mxu0 %v328
    %340 = vmatpush.bf16.msra.mxu0 %v327
    %341 = vmatpush.bf16.msra.mxu0 %v326
    %342 = vmatpush.bf16.msra.mxu0 %v325
    %343 = vmatpush.bf16.msra.mxu0 %v324
    %344 = vmatpush.bf16.msra.mxu0 %v323
    %345 = vmatpush.bf16.msra.mxu0 %v322
    %346 = vmatmul.bf16.gmra.mxu0 %v271
    %v347 = vpop.f32.mrf.mxu0
    %v348 = vadd.f32 %v289, %v347
    %v349 = vpop.f32.mrf.mxu0
    %350 = vdwg.mxu0
    %351 = vst [vmem:[#allocation8] sm:$0x3] %v348
    // Predicated region
    $region26: #{tpu_custom_call.1} parent=1 // pred_check
      _
    $region27: #{tpu_custom_call.1} parent=1 // pred_check_branch
      %353 = sbr.rel (0) target = $region29
    $region28: #{tpu_custom_call.1} parent=1 // pred_region
      %355 = vsyncadd [#allocation4], 0
      %s357 = sshll.u32 [#allocation8], 4
      %s358 = int_to_ptr.vmem [resolvable:$true] %s357
      %s359 = sshll.u32 %s3, 4
      %s360 = int_to_ptr.hbm [resolvable:$true] %s359
      %362 = dma.vmem_to_hbm [thread:$0]  %s358, 32, %s360, [#allocation4]
    $region29: #{tpu_custom_call.1} parent=1 // pred_fallthru
      _
    // Predicated region
    $region30: #{tpu_custom_call.1} parent=1 // pred_check
      _
    $region31: #{tpu_custom_call.1} parent=1 // pred_check_branch
      %364 = sbr.rel (0) target = $region33
    $region32: #{tpu_custom_call.1} parent=1 // pred_region
      %366 = dma.done [#allocation4], 32
    $region33: #{tpu_custom_call.1} parent=1 // pred_fallthru
      _
    %367 = vsyncpa [#allocation3], 1
    %368 = vsyncpa [#allocation6], 1
    %369 = vsyncpa [#allocation4], 1

</llo_original>
